<compile_context>
chip_gen: v7x
topology: tpu7x:2x2x1
jax: 0.10.0
libtpu: 0.0.40
codegen_flags: <defaults>
</compile_context>

<pallas_src>
import jax
import jax.numpy as jnp
from jax import lax
from jax.experimental import pallas as pl
from jax.experimental.pallas import tpu as pltpu

# ---- hyper-params implied by the module's __init__ (small, synthetic) -------
N_EMBED    = 32    # C  (n_embed)
BLOCK_SIZE = 8     # T  (block_size)
HEAD_SIZE  = 16    # head_size
BATCH      = 2
DROPOUT_P  = 0.0
NEG_INF    = -1e30  # finite mask value: NaN-safe even for fully-masked rows
# TODO(synk): training-mode dropout on the attention weights is not implemented
#             (would use pltpu.prng_seed / pltpu.prng_random_bits); forward here
#             matches Head.eval() semantics exactly.


def head_kernel(x_ref, wqkv_ref, bias_ref, o_ref):
    """One grid step = one batch element.

    x_ref    : (1, T, C) f32 VMEM
    wqkv_ref : (C, 3*H)  f32 VMEM   fused [k | q*scale | v] projection weights
    bias_ref : (T, T)    f32 VMEM   additive causal bias (0 / -1e30), precomputed
    o_ref    : (1, T, H) f32 VMEM
    """
    x = x_ref[0]                                     # (T, C)
    w = wqkv_ref[...]                                # (C, 3H)
    H = w.shape[1] // 3

    # Fused QKV projection: one MXU matmul (C**-0.5 already folded into W_q).
    # At realistic sizes cast x/w to bf16 for the MXU (keep f32 accumulation).
    qkv = jnp.dot(x, w, preferred_element_type=jnp.float32)          # (T, 3H)
    k = qkv[:, 0 * H:1 * H]
    q = qkv[:, 1 * H:2 * H]
    v = qkv[:, 2 * H:3 * H]
    # TODO(synk): at realistic head sizes pad each of k|q|v to a 128-lane
    #             multiple inside the fused weight so these slices stay free views.

    # Scores = q @ k^T, contracting last dims directly (no transpose copy).
    s = lax.dot_general(q, k, (((1,), (1,)), ((), ())),
                        preferred_element_type=jnp.float32)          # (T, T)
    s = s + bias_ref[...]                            # causal mask as additive bias

    # Numerically stable softmax with DEFERRED normalization:
    # normalize the (T, H) result below instead of the (T, T) matrix.
    m = jnp.max(s, axis=-1, keepdims=True)
    p = jnp.exp(s - m)                               # unnormalized probabilities
    denom = jnp.sum(p, axis=-1, keepdims=True)       # (T, 1), >= 1 (diag kept)

    # dropout(p=0 / eval) == identity

    out = jnp.dot(p, v, preferred_element_type=jnp.float32)          # (T, H)
    o_ref[0] = (out / denom).astype(o_ref.dtype)     # exact normalization


def fuse_qkv_weights(w_key, w_query, w_value, n_embed=N_EMBED):
    """Build the fused (C, 3H) weight ONCE (static), with the C**-0.5 scale
    folded into the query columns — removes a (T,T) multiply from the kernel."""
    scale = float(n_embed) ** -0.5
    return jnp.concatenate([w_key, w_query * scale, w_value], axis=1)  # [k|q|v]


def causal_bias(seq_len):
    """Precompute the additive causal bias (0 on/below diagonal, -1e30 above)."""
    r = jnp.arange(seq_len)
    return jnp.where(r[:, None] >= r[None, :], 0.0, NEG_INF).astype(jnp.float32)


def head_forward(x, wqkv, bias):
    """x: (B, T, C) f32; wqkv: (C, 3H) fused weight; bias: (T, T) causal bias.

    Returns (B, T, H) f32.
    """
    B, T, C = x.shape
    H = wqkv.shape[1] // 3
    assert T <= BLOCK_SIZE and C == N_EMBED and bias.shape == (T, T)

    cost = pl.CostEstimate(
        flops=B * (2 * T * C * 3 * H + 2 * T * T * H + 2 * T * T * H),
        transcendentals=B * T * T,
        bytes_accessed=4 * (B * T * C + C * 3 * H + T * T + B * T * H),
    )

    # TODO(synk): for a multi-head model, fuse heads so the output last dim is
    #             n_heads*H >= 128 (lane-dense stores); a single Head keeps H=16.
    return pl.pallas_call(
        head_kernel,
        out_shape=jax.ShapeDtypeStruct((B, T, H), jnp.float32),
        grid=(B,),                                    # one step per batch element
        in_specs=[
            pl.BlockSpec((1, T, C), lambda b: (b, 0, 0)),   # x: one batch / step
            pl.BlockSpec((C, 3 * H), lambda b: (0, 0)),     # fused weights (resident)
            pl.BlockSpec((T, T), lambda b: (0, 0)),         # causal bias (resident)
        ],
        out_specs=pl.BlockSpec((1, T, H), lambda b: (b, 0, 0)),
        compiler_params=pltpu.CompilerParams(
            dimension_semantics=("parallel",)),       # v7x: shard batch over 2 TCs
        cost_estimate=cost,
    )(x, wqkv, bias)


def reference_forward(x, w_key, w_query, w_value):
    """Pure-JAX reference matching the PyTorch forward (eval mode).

    Matmuls use HIGHEST precision so the reference is accurate f32 (TPU's
    DEFAULT precision would silently round operands to bf16)."""
    B, T, C = x.shape
    hi = lax.Precision.HIGHEST
    k = jnp.einsum("btc,ch->bth", x, w_key, precision=hi)
    q = jnp.einsum("btc,ch->bth", x, w_query, precision=hi)
    v = jnp.einsum("btc,ch->bth", x, w_value, precision=hi)
    wei = jnp.einsum("bqh,bkh->bqk", q, k, precision=hi) * (C ** -0.5)
    tril = jnp.tril(jnp.ones((T, T), dtype=bool))
    wei = jnp.where(tril[None], wei, -jnp.inf)
    wei = jax.nn.softmax(wei, axis=-1)
    return jnp.einsum("bqk,bkh->bqh", wei, v, precision=hi)


if __name__ == "__main__":
    key = jax.random.PRNGKey(0)
    kx, kk, kq, kv = jax.random.split(key, 4)

    B, T, C, H = BATCH, BLOCK_SIZE, N_EMBED, HEAD_SIZE

    x = jax.random.normal(kx, (B, T, C), dtype=jnp.float32)

    # Deterministic "Linear(bias=False)"-style init: U(-1/sqrt(C), 1/sqrt(C)),
    # stored transposed as (C, H) so the kernel uses x @ W directly.
    bound = 1.0 / (C ** 0.5)
    w_key   = jax.random.uniform(kk, (C, H), jnp.float32, -bound, bound)
    w_query = jax.random.uniform(kq, (C, H), jnp.float32, -bound, bound)
    w_value = jax.random.uniform(kv, (C, H), jnp.float32, -bound, bound)

    # Hoisted out of the per-call path (both are static w.r.t. the forward).
    wqkv = fuse_qkv_weights(w_key, w_query, w_value, n_embed=C)
    bias = causal_bias(T)

    out = head_forward(x, wqkv, bias)
    out = jax.block_until_ready(out)

    ref = reference_forward(x, w_key, w_query, w_value)
    assert out.shape == (B, T, H)
    # Exact softmax math in-kernel; tolerance only covers MXU multi-pass f32
    # matmul rounding vs the XLA HIGHEST-precision reference path.
    max_err = jnp.max(jnp.abs(out - ref))
    assert jnp.allclose(out, ref, atol=2e-3, rtol=2e-3), (
        f"mismatch vs reference: max abs err {max_err:.3e}")

    print("KERNEL_OK")
</pallas_src>

<mosaic_0001>
module attributes {stable_mosaic.version = 11 : i64} {
  func.func @head_kernel(%arg0: i32, %arg1: memref<1x8x32xf32, #tpu.memory_space<vmem>>, %arg2: memref<32x48xf32, #tpu.memory_space<vmem>>, %arg3: memref<8x8xf32, #tpu.memory_space<vmem>>, %arg4: memref<1x8x16xf32, #tpu.memory_space<vmem>>) attributes {dimension_semantics = [#tpu.dimension_semantics<parallel>], iteration_bounds = array<i64: 2>, scalar_prefetch = 0 : i64, scratch_operands = 0 : i64, tpu.core_type = #tpu.core_type<tc>, window_params = [{transform_indices = @transform_0, window_bounds = array<i64: 1, 8, 32>}, {pipeline_mode = #tpu.pipeline_mode<synchronous>, transform_indices = @transform_1, window_bounds = array<i64: 32, 48>}, {pipeline_mode = #tpu.pipeline_mode<synchronous>, transform_indices = @transform_2, window_bounds = array<i64: 8, 8>}, {transform_indices = @transform_3, window_bounds = array<i64: 1, 8, 16>}]} {
    %c0 = arith.constant 0 : index
    %c0_0 = arith.constant 0 : index
    %c0_1 = arith.constant 0 : index
    %0 = vector.load %arg1[%c0, %c0_0, %c0_1] : memref<1x8x32xf32, #tpu.memory_space<vmem>>, vector<1x8x32xf32>
    %1 = vector.shape_cast %0 : vector<1x8x32xf32> to vector<8x32xf32>
    %c0_2 = arith.constant 0 : index
    %c0_3 = arith.constant 0 : index
    %2 = vector.load %arg2[%c0_2, %c0_3] : memref<32x48xf32, #tpu.memory_space<vmem>>, vector<32x48xf32>
    %cst = arith.constant dense<0.000000e+00> : vector<8x48xf32>
    %3 = tpu.matmul %1, %2, %cst {dimension_numbers = #tpu.dot_dimension_numbers<[1], [0], [0], [1], [0, 0, 1, 1], [], []>} : vector<8x32xf32>, vector<32x48xf32>, vector<8x48xf32> -> vector<8x48xf32>
    %4 = vector.extract_strided_slice %3 {offsets = [0, 0], sizes = [8, 16], strides = [1, 1]} : vector<8x48xf32> to vector<8x16xf32>
    %5 = vector.extract_strided_slice %3 {offsets = [0, 16], sizes = [8, 16], strides = [1, 1]} : vector<8x48xf32> to vector<8x16xf32>
    %6 = vector.extract_strided_slice %3 {offsets = [0, 32], sizes = [8, 16], strides = [1, 1]} : vector<8x48xf32> to vector<8x16xf32>
    %cst_4 = arith.constant dense<0.000000e+00> : vector<8x8xf32>
    %7 = tpu.matmul %5, %4, %cst_4 {dimension_numbers = #tpu.dot_dimension_numbers<[1], [1], [0], [0], [0, 0, 1, 0], [], []>} : vector<8x16xf32>, vector<8x16xf32>, vector<8x8xf32> -> vector<8x8xf32>
    %c0_5 = arith.constant 0 : index
    %c0_6 = arith.constant 0 : index
    %8 = vector.load %arg3[%c0_5, %c0_6] : memref<8x8xf32, #tpu.memory_space<vmem>>, vector<8x8xf32>
    %9 = arith.addf %7, %8 : vector<8x8xf32>
    %cst_7 = arith.constant dense<0xFF800000> : vector<8xf32>
    %10 = vector.multi_reduction <maximumf>, %9, %cst_7 [1] : vector<8x8xf32> to vector<8xf32>
    %11 = vector.shape_cast %10 : vector<8xf32> to vector<8x1xf32>
    %12 = vector.broadcast %11 : vector<8x1xf32> to vector<8x8xf32>
    %13 = arith.subf %9, %12 : vector<8x8xf32>
    %14 = math.exp %13 : vector<8x8xf32>
    %cst_8 = arith.constant dense<0.000000e+00> : vector<8xf32>
    %15 = vector.multi_reduction <add>, %14, %cst_8 [1] : vector<8x8xf32> to vector<8xf32>
    %16 = vector.shape_cast %15 : vector<8xf32> to vector<8x1xf32>
    %cst_9 = arith.constant dense<0.000000e+00> : vector<8x16xf32>
    %17 = tpu.matmul %14, %6, %cst_9 {dimension_numbers = #tpu.dot_dimension_numbers<[1], [0], [0], [1], [0, 0, 1, 1], [], []>} : vector<8x8xf32>, vector<8x16xf32>, vector<8x16xf32> -> vector<8x16xf32>
    %18 = vector.broadcast %16 : vector<8x1xf32> to vector<8x16xf32>
    %19 = arith.divf %17, %18 : vector<8x16xf32>
    %c0_10 = arith.constant 0 : index
    %c0_11 = arith.constant 0 : index
    %c0_12 = arith.constant 0 : index
    %20 = vector.load %arg4[%c0_10, %c0_11, %c0_12] : memref<1x8x16xf32, #tpu.memory_space<vmem>>, vector<1x8x16xf32>
    %21 = vector.shape_cast %20 : vector<1x8x16xf32> to vector<8x16xf32>
    %22 = vector.shape_cast %19 : vector<8x16xf32> to vector<1x8x16xf32>
    tpu.vector_store %arg4[%c0_10, %c0_11, %c0_12], %22 {strides = array<i32>} : memref<1x8x16xf32, #tpu.memory_space<vmem>>, vector<1x8x16xf32>,
    return
  }
  func.func @transform_0(%arg0: i32) -> (i32, i32, i32) {
    %c0_i32 = arith.constant 0 : i32
    %c0_i32_0 = arith.constant 0 : i32
    %c0_i32_1 = arith.constant 0 : i32
    return %arg0, %c0_i32, %c0_i32_0 : i32, i32, i32
  }
  func.func @transform_1(%arg0: i32) -> (i32, i32) {
    %c0_i32 = arith.constant 0 : i32
    %c0_i32_0 = arith.constant 0 : i32
    %c0_i32_1 = arith.constant 0 : i32
    return %c0_i32, %c0_i32_0 : i32, i32
  }
  func.func @transform_2(%arg0: i32) -> (i32, i32) {
    %c0_i32 = arith.constant 0 : i32
    %c0_i32_0 = arith.constant 0 : i32
    %c0_i32_1 = arith.constant 0 : i32
    return %c0_i32, %c0_i32_0 : i32, i32
  }
  func.func @transform_3(%arg0: i32) -> (i32, i32, i32) {
    %c0_i32 = arith.constant 0 : i32
    %c0_i32_0 = arith.constant 0 : i32
    %c0_i32_1 = arith.constant 0 : i32
    return %arg0, %c0_i32, %c0_i32_0 : i32, i32, i32
  }
}

</mosaic_0001>

<llo_original>
// kernel: tpu_custom_call.1
$region0: #{tpu_custom_call.1}
  #allocation0 [shape = 'u32[]', space=smem, size = 0x4, offset = 0x4, fixed_abs, tag = 'smem constant byte address 0x4 - core index']
  #allocation1 [shape = 'u32[144,128]{1,0:T(1,128)}', space=vmem, size = 0x12000, scoped, tag = 'internal scratch']
  %s0 = inlined_call_operand.hbm [shape: f32[2,8,32], index: 0, kind: input, shape index: {}]
  %s1 = inlined_call_operand.hbm [shape: f32[32,48], index: 1, kind: input, shape index: {}]
  %s2 = inlined_call_operand.hbm [shape: f32[8,8], index: 2, kind: input, shape index: {}]
  %s3 = inlined_call_operand.hbm [shape: f32[2,8,16], index: 3, kind: output, shape index: {}]
  %s4 = sld [smem:[#allocation0]]
  $region57: #{tpu_custom_call.1} parent=0
    _
  %s6 = ssub.s32 1, %s4
  %s7 = scalar_select 0, %s6, %s4
  $region1: #{tpu_custom_call.1} parent=0
    #allocation2 [shape = 'u8[8192]{0}', space=vmem, size = 0x2000, scoped, tag = 'input window, operand 0']
    #allocation3 [shape = 's32[2]{0}', space=sflag, size = 0x8, scoped, tag = 'scoped memory for tpu_custom_call.1']
    #allocation4 [shape = 's32[2]{0}', space=sflag, size = 0x8, scoped, tag = 'scoped memory for tpu_custom_call.1']
    #allocation5 [shape = 'u8[16384]{0}', space=vmem, size = 0x4000, scoped, tag = 'input window, operand 1, single buffered']
    #allocation6 [shape = 's32[1]{0}', space=sflag, size = 0x4, scoped, tag = 'scoped memory for tpu_custom_call.1']
    #allocation7 [shape = 'u8[4096]{0}', space=vmem, size = 0x1000, scoped, tag = 'input window, operand 2, single buffered']
    #allocation8 [shape = 'u8[8192]{0}', space=vmem, size = 0x2000, scoped, tag = 'output window, operand 0']
    %8 = vsyncpa [#allocation3], 0
    %s9 = scalar_lea.sflag [#allocation3], 1
    %10 = vsyncpa %s9, 0
    %11 = vsyncpa [#allocation6], 0
    %12 = vsyncpa [#allocation4], 0
    %s13 = scalar_lea.sflag [#allocation4], 1
    %14 = vsyncpa %s13, 0
    loop: start=0, step=1, limit=4
    $region2: #{tpu_custom_call.1} parent=1 // loop_pre_header
      _
    $region3: #{tpu_custom_call.1} parent=1 // loop_header
      %s16 = sphi 0, %s20
      %p17 = scmp.ge.s32.totalorder %s16, 4
      %s26 = sphi 0, %s28
      %s29 = sphi 0, %s26
      %s30 = sphi 0, %s29
      %s46 = sphi 0, %s30
      %s50 = sphi 0, %s50
      %s52 = sphi 0, %s50
      %s53 = sphi 0, %s52
      %s67 = sphi 0, %s53
      %s71 = sphi 0, %s71
      %s73 = sphi 0, %s71
      %s74 = sphi 0, %s73
      %s88 = sphi 0, %s74
      %s94 = sphi 0, %s96
      %s97 = sphi 0, %s94
      %s98 = sphi 0, %s97
      %s114 = sphi 0, %s98
    $region4: #{tpu_custom_call.1} parent=1 // loop_header_branch
      %19 = sbr.rel (%p17) target = $region8
    $region5: #{tpu_custom_call.1} parent=1 // loop_body
      %s21 = ssub.s32 %s16, 1
      %s22 = ssub.s32 %s16, 2
      %s23 = sadd.s32 %s16, 1
      %s24 = ssub.s32 %s16, %s23
      %p25 = scmp.eq.s32.totalorder %s24, 0
      %s27 = sadd.s32 %s26, 1
      %s28 = scalar_select %p25, %s26, %s27
      %p31 = pneg %p25
      %p32 = scmp.eq.s32.totalorder %s16, 1
      %p33 = por %p31, %p32
      %p34 = scmp.ne.s32.totalorder %s26, %s29
      %p35 = scmp.eq.s32.totalorder %s16, 0
      %p36 = por %p34, %p35
      %p37 = scmp.ne.s32.totalorder %s26, %s29
      %p38 = scmp.eq.s32.totalorder %s21, 1
      %p39 = por %p37, %p38
      %p40 = scmp.ne.s32.totalorder %s29, %s30
      %p41 = scmp.eq.s32.totalorder %s21, 0
      %p42 = por %p40, %p41
      %p43 = scmp.ne.s32.totalorder %s29, %s30
      %p44 = scmp.eq.s32.totalorder %s22, 1
      %p45 = por %p43, %p44
      %p47 = scmp.ne.s32.totalorder %s30, %s46
      %p48 = scmp.eq.s32.totalorder %s22, 0
      %p49 = por %p47, %p48
      %s51 = sadd.s32 %s50, 1
      %p54 = scmp.eq.s32.totalorder %s16, 1
      %p55 = scmp.ne.s32.totalorder %s50, %s52
      %p56 = scmp.eq.s32.totalorder %s16, 0
      %p57 = por %p55, %p56
      %p58 = scmp.ne.s32.totalorder %s50, %s52
      %p59 = scmp.eq.s32.totalorder %s21, 1
      %p60 = por %p58, %p59
      %p61 = scmp.ne.s32.totalorder %s52, %s53
      %p62 = scmp.eq.s32.totalorder %s21, 0
      %p63 = por %p61, %p62
      %p64 = scmp.ne.s32.totalorder %s52, %s53
      %p65 = scmp.eq.s32.totalorder %s22, 1
      %p66 = por %p64, %p65
      %p68 = scmp.ne.s32.totalorder %s53, %s67
      %p69 = scmp.eq.s32.totalorder %s22, 0
      %p70 = por %p68, %p69
      %s72 = sadd.s32 %s71, 1
      %p75 = scmp.eq.s32.totalorder %s16, 1
      %p76 = scmp.ne.s32.totalorder %s71, %s73
      %p77 = scmp.eq.s32.totalorder %s16, 0
      %p78 = por %p76, %p77
      %p79 = scmp.ne.s32.totalorder %s71, %s73
      %p80 = scmp.eq.s32.totalorder %s21, 1
      %p81 = por %p79, %p80
      %p82 = scmp.ne.s32.totalorder %s73, %s74
      %p83 = scmp.eq.s32.totalorder %s21, 0
      %p84 = por %p82, %p83
      %p85 = scmp.ne.s32.totalorder %s73, %s74
      %p86 = scmp.eq.s32.totalorder %s22, 1
      %p87 = por %p85, %p86
      %p89 = scmp.ne.s32.totalorder %s74, %s88
      %p90 = scmp.eq.s32.totalorder %s22, 0
      %p91 = por %p89, %p90
      %s92 = ssub.s32 %s16, %s23
      %p93 = scmp.eq.s32.totalorder %s92, 0
      %s95 = sadd.s32 %s94, 1
      %s96 = scalar_select %p93, %s94, %s95
      %p99 = pneg %p93
      %p100 = scmp.eq.s32.totalorder %s16, 1
      %p101 = por %p99, %p100
      %p102 = scmp.ne.s32.totalorder %s94, %s97
      %p103 = scmp.eq.s32.totalorder %s16, 0
      %p104 = por %p102, %p103
      %p105 = scmp.ne.s32.totalorder %s94, %s97
      %p106 = scmp.eq.s32.totalorder %s21, 1
      %p107 = por %p105, %p106
      %p108 = scmp.ne.s32.totalorder %s97, %s98
      %p109 = scmp.eq.s32.totalorder %s21, 0
      %p110 = por %p108, %p109
      %p111 = scmp.ne.s32.totalorder %s97, %s98
      %p112 = scmp.eq.s32.totalorder %s22, 1
      %p113 = por %p111, %p112
      %p115 = scmp.ne.s32.totalorder %s98, %s114
      %p116 = scmp.eq.s32.totalorder %s22, 0
      %p117 = por %p115, %p116
      %p118 = scmp.le.s32.totalorder 1, %s16
      %p119 = scmp.lt.s32.totalorder %s16, 3
      %p120 = pnand %p118, %p119
      %p121 = pneg %p120
      // Predicated region
      $region9: #{tpu_custom_call.1} parent=5 // pred_check
        _
      $region10: #{tpu_custom_call.1} parent=5 // pred_check_branch
        %123 = sbr.rel (%p120) target = $region12
      $region11: #{tpu_custom_call.1} parent=5 // pred_region
        %s124 = ssub.s32 %s16, 1
        // Predicated region
        $region13: #{tpu_custom_call.1} parent=11 // pred_check
          %p125 = pneg %p63
        $region14: #{tpu_custom_call.1} parent=11 // pred_check_branch
          %127 = sbr.rel (%p125) target = $region16
        $region15: #{tpu_custom_call.1} parent=11 // pred_region
          %s129 = ssub.s32 512, 512
          %130 = vsyncadd [#allocation6], %s129
          %s131 = sshll.u32 [#allocation5], 4
          %s132 = int_to_ptr.vmem [resolvable:$true] %s131
          %137 = dma.hbm_to_vmem [thread:$0]  %s1, 512, %s132, [#allocation6], 128, 128, 8
        $region16: #{tpu_custom_call.1} parent=11 // pred_fallthru
          _
        // Predicated region
        $region17: #{tpu_custom_call.1} parent=11 // pred_check
          %p138 = pneg %p84
        $region18: #{tpu_custom_call.1} parent=11 // pred_check_branch
          %140 = sbr.rel (%p138) target = $region20
        $region19: #{tpu_custom_call.1} parent=11 // pred_region
          %s142 = ssub.s32 128, 128
          %143 = vsyncadd [#allocation6], %s142
          %s145 = sshll.u32 [#allocation7], 4
          %s146 = int_to_ptr.vmem [resolvable:$true] %s145
          %148 = dma.hbm_to_vmem [thread:$0]  %s2, 128, %s146, [#allocation6]
        $region20: #{tpu_custom_call.1} parent=11 // pred_fallthru
          _
      $region12: #{tpu_custom_call.1} parent=5 // pred_fallthru
        _
      %p149 = scmp.lt.s32.totalorder %s16, 2
      // Predicated region
      $region21: #{tpu_custom_call.1} parent=5 // pred_check
        %p150 = pneg %p149
      $region22: #{tpu_custom_call.1} parent=5 // pred_check_branch
        %152 = sbr.rel (%p150) target = $region24
      $region23: #{tpu_custom_call.1} parent=5 // pred_region
        // Predicated region
        $region25: #{tpu_custom_call.1} parent=23 // pred_check
          %p153 = pneg %p36
        $region26: #{tpu_custom_call.1} parent=23 // pred_check_branch
          %155 = sbr.rel (%p153) target = $region28
        $region27: #{tpu_custom_call.1} parent=23 // pred_region
          %s156 = sand.u32 %s26, 1
          %s157 = scalar_lea.sflag [#allocation3], %s156
          %s158 = sand.u32 %s26, 1
          %s159 = smul.addr %s158, 8
          %s160 = scalar_lea.vmem [#allocation2], %s159
          %s162 = ssub.s32 128, 128
          %163 = vsyncadd %s157, %s162
          %s164 = smul.addr %s16, 128
          %s165 = scalar_lea.hbm %s0, %s164
          %s167 = sshll.u32 %s160, 4
          %s168 = int_to_ptr.vmem [resolvable:$true] %s167
          %170 = dma.hbm_to_vmem [thread:$0]  %s165, 128, %s168, %s157
        $region28: #{tpu_custom_call.1} parent=23 // pred_fallthru
          _
      $region24: #{tpu_custom_call.1} parent=5 // pred_fallthru
        _
      %p171 = scmp.le.s32.totalorder 1, %s16
      %p172 = scmp.lt.s32.totalorder %s16, 3
      %p173 = pnand %p171, %p172
      %p174 = pneg %p173
      // Predicated region
      $region29: #{tpu_custom_call.1} parent=5 // pred_check
        _
      $region30: #{tpu_custom_call.1} parent=5 // pred_check_branch
        %176 = sbr.rel (%p173) target = $region32
      $region31: #{tpu_custom_call.1} parent=5 // pred_region
        %s177 = ssub.s32 %s16, 1
        %s178 = sand.u32 %s29, 1
        %s179 = scalar_lea.sflag [#allocation3], %s178
        %s180 = sand.u32 %s29, 1
        %s181 = smul.addr %s180, 8
        %s182 = scalar_lea.vmem [#allocation2], %s181
        // Predicated region
        $region33: #{tpu_custom_call.1} parent=31 // pred_check
          %p183 = pneg %p42
        $region34: #{tpu_custom_call.1} parent=31 // pred_check_branch
          %185 = sbr.rel (%p183) target = $region36
        $region35: #{tpu_custom_call.1} parent=31 // pred_region
          %186 = dma.done %s179, 128
        $region36: #{tpu_custom_call.1} parent=31 // pred_fallthru
          _
        // Predicated region
        $region37: #{tpu_custom_call.1} parent=31 // pred_check
          %p187 = pneg %p63
        $region38: #{tpu_custom_call.1} parent=31 // pred_check_branch
          %189 = sbr.rel (%p187) target = $region40
        $region39: #{tpu_custom_call.1} parent=31 // pred_region
          %190 = dma.done [#allocation6], 512
        $region40: #{tpu_custom_call.1} parent=31 // pred_fallthru
          _
        // Predicated region
        $region41: #{tpu_custom_call.1} parent=31 // pred_check
          %p191 = pneg %p84
        $region42: #{tpu_custom_call.1} parent=31 // pred_check_branch
          %193 = sbr.rel (%p191) target = $region44
        $region43: #{tpu_custom_call.1} parent=31 // pred_region
          %194 = dma.done [#allocation6], 128
        $region44: #{tpu_custom_call.1} parent=31 // pred_fallthru
          _
        %s195 = sand.u32 %s29, 1
        %s196 = scalar_lea.sflag [#allocation3], %s195
        %s197 = sand.u32 %s29, 1
        %s198 = smul.addr %s197, 8
        %s199 = scalar_lea.vmem [#allocation2], %s198
        %p200 = pneg %p42
        %p201 = pneg %p39
        %p202 = pneg %p63
        %p203 = pneg %p60
        %p204 = pneg %p84
        %p205 = pneg %p81
        %p206 = pneg %p110
        %p207 = pneg %p107
        %s208 = sand.u32 %s97, 1
        %s209 = scalar_lea.sflag [#allocation4], %s208
        %s210 = sand.u32 %s97, 1
        %s211 = smul.addr %s210, 8
        %s212 = scalar_lea.vmem [#allocation8], %s211
        %v213 = vld [vmem:[%s182] sm:$0xff]
        %v214 = vld [vmem:[#allocation5] sm:$0xff]
        %v215 = vld [vmem:[#allocation5 + $0x8] sm:$0xff]
        %v216 = vld [vmem:[#allocation5 + $0x10] sm:$0xff]
        %v217 = vld [vmem:[#allocation5 + $0x18] sm:$0xff]
        %vm218 = vcmask 261120
        %v220 = vsel %vm218, %v213, 0
        %222 = vmatprep.subr.mxu0 0.0
        %223 = vmatpush1.msra.mxu0 %v214
        %224 = vmatprep.subr.mxu0 0.0
        %225 = vmatpush1.msra.mxu0 %v215
        %226 = vmatprep.subr.mxu0 0.0
        %227 = vmatpush1.msra.mxu0 %v216
        %228 = vmatprep.subr.mxu0 0.0
        %229 = vmatpush1.msra.mxu0 %v217
        %230 = vmatprep.subr.mxu0 0.0
        %231 = vmatpush1.msra.mxu0 0.0
        %232 = vmatprep.subr.mxu0 0.0
        %233 = vmatpush1.msra.mxu0 0.0
        %234 = vmatprep.subr.mxu0 0.0
        %235 = vmatpush1.msra.mxu0 0.0
        %236 = vmatprep.subr.mxu0 0.0
        %237 = vmatpush1.msra.mxu0 0.0
        %238 = vmatprep.subr.mxu0 0.0
        %239 = vmatpush1.msra.mxu0 0.0
        %240 = vmatprep.subr.mxu0 0.0
        %241 = vmatpush1.msra.mxu0 0.0
        %242 = vmatprep.subr.mxu0 0.0
        %243 = vmatpush1.msra.mxu0 0.0
        %244 = vmatprep.subr.mxu0 0.0
        %245 = vmatpush1.msra.mxu0 0.0
        %246 = vmatprep.subr.mxu0 0.0
        %247 = vmatpush1.msra.mxu0 0.0
        %248 = vmatprep.subr.mxu0 0.0
        %249 = vmatpush1.msra.mxu0 0.0
        %250 = vmatprep.subr.mxu0 0.0
        %251 = vmatpush1.msra.mxu0 0.0
        %252 = vmatprep.subr.mxu0 0.0
        %253 = vmatpush1.msra.mxu0 0.0
        %254 = vmatprep.subr.mxu0 0.0
        %255 = vmatpush1.msra.mxu0 0.0
        %256 = vmatprep.subr.mxu0 0.0
        %257 = vmatpush1.msra.mxu0 0.0
        %258 = vmatprep.subr.mxu0 0.0
        %259 = vmatpush1.msra.mxu0 0.0
        %260 = vmatprep.subr.mxu0 0.0
        %261 = vmatpush1.msra.mxu0 0.0
        %262 = vmatprep.subr.mxu0 0.0
        %263 = vmatpush1.msra.mxu0 0.0
        %264 = vmatprep.subr.mxu0 0.0
        %265 = vmatpush1.msra.mxu0 0.0
        %266 = vmatprep.subr.mxu0 0.0
        %267 = vmatpush1.msra.mxu0 0.0
        %268 = vmatprep.subr.mxu0 0.0
        %269 = vmatpush1.msra.mxu0 0.0
        %270 = vmatprep.subr.mxu0 0.0
        %271 = vmatpush1.msra.mxu0 0.0
        %272 = vmatprep.subr.mxu0 0.0
        %273 = vmatpush1.msra.mxu0 0.0
        %274 = vmatprep.subr.mxu0 0.0
        %275 = vmatpush1.msra.mxu0 0.0
        %276 = vmatprep.subr.mxu0 0.0
        %277 = vmatpush1.msra.mxu0 0.0
        %278 = vmatprep.subr.mxu0 0.0
        %279 = vmatpush1.msra.mxu0 0.0
        %280 = vmatprep.subr.mxu0 0.0
        %281 = vmatpush1.msra.mxu0 0.0
        %282 = vmatprep.subr.mxu0 0.0
        %283 = vmatpush1.msra.mxu0 0.0
        %284 = vmatprep.subr.mxu0 0.0
        %285 = vmatpush1.msra.mxu0 0.0
        %286 = vmatprep.mubr.f32.mxu0 0.0
        %287 = vmatmul.mubr.f32.gmra.mrb[0].mxu0 %v220
        %v288 = vpop.f32.mrb[0].mxu0
        %v289 = vadd.f32 0.0, %v288
        %v290 = vpop.f32.mrb[0].mxu0
        %291 = vdwg.mxu0
        %v292 = vld [vmem:[#allocation7] sm:$0xff]
        %294 = vrot.lane.b32.xlu0 %v289, 112
        %v295 = vpop.permute.xlu0 %294
        %vm296 = vcmask 130048
        %v297 = vsel %vm296, %v295, 0
        %v299 = vsel %vm296, %v289, 0
        %301 = vmatprep.subr.mxu0 0.0
        %302 = vmatpush1.xpose.msra.mxu0 %v299
        %303 = vmatprep.subr.mxu0 0.0
        %304 = vmatpush1.xpose.msra.mxu0 0.0
        %305 = vmatprep.subr.mxu0 0.0
        %306 = vmatpush1.xpose.msra.mxu0 0.0
        %307 = vmatprep.subr.mxu0 0.0
        %308 = vmatpush1.xpose.msra.mxu0 0.0
        %309 = vmatprep.subr.mxu0 0.0
        %310 = vmatpush1.xpose.msra.mxu0 0.0
        %311 = vmatprep.subr.mxu0 0.0
        %312 = vmatpush1.xpose.msra.mxu0 0.0
        %313 = vmatprep.subr.mxu0 0.0
        %314 = vmatpush1.xpose.msra.mxu0 0.0
        %315 = vmatprep.subr.mxu0 0.0
        %316 = vmatpush1.xpose.msra.mxu0 0.0
        %317 = vmatprep.subr.mxu0 0.0
        %318 = vmatpush1.xpose.msra.mxu0 0.0
        %319 = vmatprep.subr.mxu0 0.0
        %320 = vmatpush1.xpose.msra.mxu0 0.0
        %321 = vmatprep.subr.mxu0 0.0
        %322 = vmatpush1.xpose.msra.mxu0 0.0
        %323 = vmatprep.subr.mxu0 0.0
        %324 = vmatpush1.xpose.msra.mxu0 0.0
        %325 = vmatprep.subr.mxu0 0.0
        %326 = vmatpush1.xpose.msra.mxu0 0.0
        %327 = vmatprep.subr.mxu0 0.0
        %328 = vmatpush1.xpose.msra.mxu0 0.0
        %329 = vmatprep.subr.mxu0 0.0
        %330 = vmatpush1.xpose.msra.mxu0 0.0
        %331 = vmatprep.subr.mxu0 0.0
        %332 = vmatpush1.xpose.msra.mxu0 0.0
        %333 = vmatprep.subr.mxu0 0.0
        %334 = vmatpush1.xpose.msra.mxu0 0.0
        %335 = vmatprep.subr.mxu0 0.0
        %336 = vmatpush1.xpose.msra.mxu0 0.0
        %337 = vmatprep.subr.mxu0 0.0
        %338 = vmatpush1.xpose.msra.mxu0 0.0
        %339 = vmatprep.subr.mxu0 0.0
        %340 = vmatpush1.xpose.msra.mxu0 0.0
        %341 = vmatprep.subr.mxu0 0.0
        %342 = vmatpush1.xpose.msra.mxu0 0.0
        %343 = vmatprep.subr.mxu0 0.0
        %344 = vmatpush1.xpose.msra.mxu0 0.0
        %345 = vmatprep.subr.mxu0 0.0
        %346 = vmatpush1.xpose.msra.mxu0 0.0
        %347 = vmatprep.subr.mxu0 0.0
        %348 = vmatpush1.xpose.msra.mxu0 0.0
        %349 = vmatprep.subr.mxu0 0.0
        %350 = vmatpush1.xpose.msra.mxu0 0.0
        %351 = vmatprep.subr.mxu0 0.0
        %352 = vmatpush1.xpose.msra.mxu0 0.0
        %353 = vmatprep.subr.mxu0 0.0
        %354 = vmatpush1.xpose.msra.mxu0 0.0
        %355 = vmatprep.subr.mxu0 0.0
        %356 = vmatpush1.xpose.msra.mxu0 0.0
        %357 = vmatprep.subr.mxu0 0.0
        %358 = vmatpush1.xpose.msra.mxu0 0.0
        %359 = vmatprep.subr.mxu0 0.0
        %360 = vmatpush1.xpose.msra.mxu0 0.0
        %361 = vmatprep.subr.mxu0 0.0
        %362 = vmatpush1.xpose.msra.mxu0 0.0
        %363 = vmatprep.subr.mxu0 0.0
        %364 = vmatpush1.xpose.msra.mxu0 0.0
        %365 = vmatprep.mubr.f32.mxu0 0.0
        %366 = vmatmul.mubr.f32.gmra.mrb[0].mxu0 %v297
        %v367 = vpop.f32.mrb[0].mxu0
        %v368 = vadd.f32 %v292, %v367
        %v369 = vpop.f32.mrb[0].mxu0
        %370 = vdwg.mxu0
        %vm371 = vcmask 64512
        %v372 = vsel %vm371, %v368, -inf
        %373 = vmax.xlane.f32.xlu0 %v372
        %v374 = vpop.xlane.xlu0 %373
        %v375 = vsub.f32 %v368, %v374
        %v376 = vmul.f32 %v375, 1.442695
        %v377 = vpow.pop %v376
        %v378 = vsel %vm371, %v377, 0.0
        %379 = vadd.xlane.f32.xlu0 %v378
        %v380 = vpop.xlane.xlu0 %379
        %381 = vrot.lane.b32.xlu0 %v289, 96
        %v382 = vpop.permute.xlu0 %381
        %v385 = vsel %vm371, %v377, 0
        %387 = vmatprep.subr.mxu0 0.0
        %388 = vmatpush1.msra.mxu0 %v382
        %389 = vmatprep.subr.mxu0 0.0
        %390 = vmatpush1.msra.mxu0 0.0
        %391 = vmatprep.subr.mxu0 0.0
        %392 = vmatpush1.msra.mxu0 0.0
        %393 = vmatprep.subr.mxu0 0.0
        %394 = vmatpush1.msra.mxu0 0.0
        %395 = vmatprep.subr.mxu0 0.0
        %396 = vmatpush1.msra.mxu0 0.0
        %397 = vmatprep.subr.mxu0 0.0
        %398 = vmatpush1.msra.mxu0 0.0
        %399 = vmatprep.subr.mxu0 0.0
        %400 = vmatpush1.msra.mxu0 0.0
        %401 = vmatprep.subr.mxu0 0.0
        %402 = vmatpush1.msra.mxu0 0.0
        %403 = vmatprep.subr.mxu0 0.0
        %404 = vmatpush1.msra.mxu0 0.0
        %405 = vmatprep.subr.mxu0 0.0
        %406 = vmatpush1.msra.mxu0 0.0
        %407 = vmatprep.subr.mxu0 0.0
        %408 = vmatpush1.msra.mxu0 0.0
        %409 = vmatprep.subr.mxu0 0.0
        %410 = vmatpush1.msra.mxu0 0.0
        %411 = vmatprep.subr.mxu0 0.0
        %412 = vmatpush1.msra.mxu0 0.0
        %413 = vmatprep.subr.mxu0 0.0
        %414 = vmatpush1.msra.mxu0 0.0
        %415 = vmatprep.subr.mxu0 0.0
        %416 = vmatpush1.msra.mxu0 0.0
        %417 = vmatprep.subr.mxu0 0.0
        %418 = vmatpush1.msra.mxu0 0.0
        %419 = vmatprep.subr.mxu0 0.0
        %420 = vmatpush1.msra.mxu0 0.0
        %421 = vmatprep.subr.mxu0 0.0
        %422 = vmatpush1.msra.mxu0 0.0
        %423 = vmatprep.subr.mxu0 0.0
        %424 = vmatpush1.msra.mxu0 0.0
        %425 = vmatprep.subr.mxu0 0.0
        %426 = vmatpush1.msra.mxu0 0.0
        %427 = vmatprep.subr.mxu0 0.0
        %428 = vmatpush1.msra.mxu0 0.0
        %429 = vmatprep.subr.mxu0 0.0
        %430 = vmatpush1.msra.mxu0 0.0
        %431 = vmatprep.subr.mxu0 0.0
        %432 = vmatpush1.msra.mxu0 0.0
        %433 = vmatprep.subr.mxu0 0.0
        %434 = vmatpush1.msra.mxu0 0.0
        %435 = vmatprep.subr.mxu0 0.0
        %436 = vmatpush1.msra.mxu0 0.0
        %437 = vmatprep.subr.mxu0 0.0
        %438 = vmatpush1.msra.mxu0 0.0
        %439 = vmatprep.subr.mxu0 0.0
        %440 = vmatpush1.msra.mxu0 0.0
        %441 = vmatprep.subr.mxu0 0.0
        %442 = vmatpush1.msra.mxu0 0.0
        %443 = vmatprep.subr.mxu0 0.0
        %444 = vmatpush1.msra.mxu0 0.0
        %445 = vmatprep.subr.mxu0 0.0
        %446 = vmatpush1.msra.mxu0 0.0
        %447 = vmatprep.subr.mxu0 0.0
        %448 = vmatpush1.msra.mxu0 0.0
        %449 = vmatprep.subr.mxu0 0.0
        %450 = vmatpush1.msra.mxu0 0.0
        %451 = vmatprep.mubr.f32.mxu0 0.0
        %452 = vmatmul.mubr.f32.gmra.mrb[0].mxu0 %v385
        %v453 = vpop.f32.mrb[0].mxu0
        %v454 = vadd.f32 0.0, %v453
        %v455 = vpop.f32.mrb[0].mxu0
        %456 = vdwg.mxu0
        %v457 = vrcp.pop %v380
        %v458 = vmul.f32 %v454, %v457
        %459 = vst.msk [vmem:[%s212] sm:$0xff] %vm296, %v458
        %s460 = sand.u32 %s97, 1
        %s461 = scalar_lea.sflag [#allocation4], %s460
        %s462 = sand.u32 %s97, 1
        %s463 = smul.addr %s462, 8
        %s464 = scalar_lea.vmem [#allocation8], %s463
        // Predicated region
        $region45: #{tpu_custom_call.1} parent=31 // pred_check
          %p465 = pneg %p107
        $region46: #{tpu_custom_call.1} parent=31 // pred_check_branch
          %467 = sbr.rel (%p465) target = $region48
        $region47: #{tpu_custom_call.1} parent=31 // pred_region
          %s469 = ssub.s32 128, 128
          %470 = vsyncadd %s461, %s469
          %s471 = smul.addr %s21, 128
          %s472 = scalar_lea.hbm %s3, %s471
          %s474 = sshll.u32 %s464, 4
          %s475 = int_to_ptr.vmem [resolvable:$true] %s474
          %477 = dma.vmem_to_hbm [thread:$0]  %s475, 128, %s472, %s461
        $region48: #{tpu_custom_call.1} parent=31 // pred_fallthru
          _
      $region32: #{tpu_custom_call.1} parent=5 // pred_fallthru
        _
      %p478 = scmp.le.s32.totalorder 2, %s16
      // Predicated region
      $region49: #{tpu_custom_call.1} parent=5 // pred_check
        %p479 = pneg %p478
      $region50: #{tpu_custom_call.1} parent=5 // pred_check_branch
        %481 = sbr.rel (%p479) target = $region52
      $region51: #{tpu_custom_call.1} parent=5 // pred_region
        %s482 = ssub.s32 %s16, 2
        // Predicated region
        $region53: #{tpu_custom_call.1} parent=51 // pred_check
          %p483 = pneg %p113
        $region54: #{tpu_custom_call.1} parent=51 // pred_check_branch
          %485 = sbr.rel (%p483) target = $region56
        $region55: #{tpu_custom_call.1} parent=51 // pred_region
          %s486 = sand.u32 %s98, 1
          %s487 = scalar_lea.sflag [#allocation4], %s486
          %s488 = sand.u32 %s98, 1
          %s489 = smul.addr %s488, 8
          %s490 = scalar_lea.vmem [#allocation8], %s489
          %491 = dma.done %s487, 128
        $region56: #{tpu_custom_call.1} parent=51 // pred_fallthru
          _
      $region52: #{tpu_custom_call.1} parent=5 // pred_fallthru
        _
    $region6: #{tpu_custom_call.1} parent=1 // loop_footer
      %s20 = sadd.s32 1, %s16
    $region7: #{tpu_custom_call.1} parent=1 // loop_footer_branch
      %15 = sbr.rel target = $region3
    $region8: #{tpu_custom_call.1} parent=1 // loop_exit
      _
    %492 = vsyncpa [#allocation3], 1
    %s493 = scalar_lea.sflag [#allocation3], 1
    %494 = vsyncpa %s493, 1
    %495 = vsyncpa [#allocation6], 1
    %496 = vsyncpa [#allocation4], 1
    %s497 = scalar_lea.sflag [#allocation4], 1
    %498 = vsyncpa %s497, 1

</llo_original>
